<compile_context>
chip_gen: v5e
topology: v5e:2x2
jax: 0.10.0
libtpu: 0.0.40
codegen_flags: <defaults>
</compile_context>

<pallas_src>
import jax
import jax.numpy as jnp
from jax.experimental import pallas as pl
from jax.experimental.pallas import tpu as pltpu

# ----- model hyperparameters (small, consistent with the module) -----
BATCH = 2
SEQ = 8
EMB_SIZE = 100            # vocab size
HIDDEN1 = 32              # embedding dim
HIDDEN2 = SEQ * HIDDEN1   # 256 == flattened embedding size (nn.Linear input)
NUM_CLASSES = 5
PAD_CLASSES = 128         # lane-dense class dimension inside the kernel


def embnet_kernel(ids_ref,    # VMEM (SEQ*B, 1) int32, token-major: row r = t*B + b
                  emb_ref,    # VMEM (VOCAB, H1) f32
                  wt_ref,     # VMEM (H2, 128) f32   fc.weight^T, zero-padded classes
                  b_ref,      # VMEM (1, 128) f32    fc.bias, zero-padded classes
                  out_ref,    # VMEM (B, 128) f32    softmax probs (padded lanes ~0)
                  gath_ref):  # VMEM scratch (SEQ*B, H1) f32
    # --- Embedding gather as a one-hot matmul on the MXU ---
    vocab_iota = jax.lax.broadcasted_iota(jnp.int32, (SEQ * BATCH, EMB_SIZE), 1)
    onehot = (vocab_iota == ids_ref[...]).astype(jnp.float32)        # (SEQ*B, VOCAB)
    gath_ref[...] = jnp.dot(onehot, emb_ref[...],
                            preferred_element_type=jnp.float32)      # (SEQ*B, H1)

    # --- Flatten + Linear, restructured to avoid a (16,32)->(2,256) relayout:
    #     logits[b, :] = sum_t gathered[t*B + b, :] @ W[t*H1:(t+1)*H1, :]
    acc = jnp.zeros((BATCH, PAD_CLASSES), jnp.float32)
    for t in range(SEQ):  # static unroll: 8 small sublane-aligned MXU calls
        g_t = gath_ref[t * BATCH:(t + 1) * BATCH, :]                 # (B, H1)
        w_t = wt_ref[t * HIDDEN1:(t + 1) * HIDDEN1, :]               # (H1, 128)
        acc = acc + jnp.dot(g_t, w_t, preferred_element_type=jnp.float32)
    logits = acc + b_ref[...]                                        # (B, 128)

    # --- Softmax over the 5 real classes; padded lanes masked to -inf ---
    lane = jax.lax.broadcasted_iota(jnp.int32, (BATCH, PAD_CLASSES), 1)
    logits = jnp.where(lane < NUM_CLASSES, logits, -jnp.inf)
    m = jnp.max(logits, axis=1, keepdims=True)
    e = jnp.exp(logits - m)
    denom = jnp.sum(e, axis=1, keepdims=True)
    out_ref[...] = e * pl.reciprocal(denom, approx=True)


def embnet_forward(x_ids, emb_table, fc_weight, fc_bias):
    """x_ids: (B, SEQ) int32; fc_weight: (5, H2) [PyTorch layout]; fc_bias: (5,)."""
    # Token-major flattened ids so per-token rows of the gather are contiguous.
    ids_tm = x_ids.T.reshape(SEQ * BATCH, 1).astype(jnp.int32)        # row = t*B + b
    # fc.weight^T padded to a lane-dense 128-wide class dimension.
    wt_pad = jnp.zeros((HIDDEN2, PAD_CLASSES), jnp.float32)
    wt_pad = wt_pad.at[:, :NUM_CLASSES].set(fc_weight.T.astype(jnp.float32))
    b_pad = jnp.zeros((1, PAD_CLASSES), jnp.float32)
    b_pad = b_pad.at[0, :NUM_CLASSES].set(fc_bias.astype(jnp.float32))

    out_pad = pl.pallas_call(
        embnet_kernel,
        out_shape=jax.ShapeDtypeStruct((BATCH, PAD_CLASSES), jnp.float32),
        grid=(1,),
        in_specs=[
            pl.BlockSpec((SEQ * BATCH, 1), lambda i: (0, 0)),
            pl.BlockSpec((EMB_SIZE, HIDDEN1), lambda i: (0, 0)),
            pl.BlockSpec((HIDDEN2, PAD_CLASSES), lambda i: (0, 0)),
            pl.BlockSpec((1, PAD_CLASSES), lambda i: (0, 0)),
        ],
        out_specs=pl.BlockSpec((BATCH, PAD_CLASSES), lambda i: (0, 0)),
        scratch_shapes=[pltpu.VMEM((SEQ * BATCH, HIDDEN1), jnp.float32)],
        compiler_params=pltpu.CompilerParams(
            # Single step today; for real batch sizes grid over batch tiles and
            # mark that axis "parallel" (two TCs on v7x).
            dimension_semantics=("arbitrary",)),
    )(ids_tm, emb_table, wt_pad, b_pad)

    return out_pad[:, :NUM_CLASSES]


def reference_forward(x_ids, emb_table, fc_weight, fc_bias):
    embeds = emb_table[x_ids].reshape(x_ids.shape[0], -1)        # (B, H2)
    logits = embeds @ fc_weight.T + fc_bias                      # (B, 5)
    return jax.nn.softmax(logits, axis=1)


if __name__ == "__main__":
    key = jax.random.PRNGKey(0)
    k_ids, k_emb, k_w, k_b = jax.random.split(key, 4)

    # deterministic inputs / parameters
    x_ids = jax.random.randint(k_ids, (BATCH, SEQ), 0, EMB_SIZE, dtype=jnp.int32)
    emb_table = jax.random.normal(k_emb, (EMB_SIZE, HIDDEN1), dtype=jnp.float32)
    # PyTorch Linear default-ish init (uniform in +/- 1/sqrt(fan_in))
    bound = 1.0 / jnp.sqrt(jnp.float32(HIDDEN2))
    fc_weight = jax.random.uniform(k_w, (NUM_CLASSES, HIDDEN2),
                                   minval=-bound, maxval=bound, dtype=jnp.float32)
    fc_bias = jax.random.uniform(k_b, (NUM_CLASSES,),
                                 minval=-bound, maxval=bound, dtype=jnp.float32)

    out = embnet_forward(x_ids, emb_table, fc_weight, fc_bias)
    out = jax.block_until_ready(out)

    ref = reference_forward(x_ids, emb_table, fc_weight, fc_bias)
    assert out.shape == (BATCH, NUM_CLASSES)
    # approx reciprocal in the softmax epilogue is ~bf16-accurate -> relaxed tol
    assert jnp.allclose(out, ref, atol=5e-3, rtol=5e-3), "mismatch vs reference"

    print("KERNEL_OK")
</pallas_src>

<mosaic_0001>
module attributes {stable_mosaic.version = 11 : i64} {
  func.func @embnet_kernel(%arg0: i32, %arg1: memref<16x1xi32, #tpu.memory_space<vmem>>, %arg2: memref<100x32xf32, #tpu.memory_space<vmem>>, %arg3: memref<256x128xf32, #tpu.memory_space<vmem>>, %arg4: memref<1x128xf32, #tpu.memory_space<vmem>>, %arg5: memref<2x128xf32, #tpu.memory_space<vmem>>, %arg6: memref<16x32xf32, #tpu.memory_space<vmem>>) attributes {dimension_semantics = [#tpu.dimension_semantics<arbitrary>], iteration_bounds = array<i64: 1>, scalar_prefetch = 0 : i64, scratch_operands = 1 : i64, tpu.core_type = #tpu.core_type<tc>, window_params = [{pipeline_mode = #tpu.pipeline_mode<synchronous>, transform_indices = @transform_0, window_bounds = array<i64: 16, 1>}, {pipeline_mode = #tpu.pipeline_mode<synchronous>, transform_indices = @transform_1, window_bounds = array<i64: 100, 32>}, {pipeline_mode = #tpu.pipeline_mode<synchronous>, transform_indices = @transform_2, window_bounds = array<i64: 256, 128>}, {pipeline_mode = #tpu.pipeline_mode<synchronous>, transform_indices = @transform_3, window_bounds = array<i64: 1, 128>}, {pipeline_mode = #tpu.pipeline_mode<synchronous>, transform_indices = @transform_4, window_bounds = array<i64: 2, 128>}]} {
    %0 = tpu.iota {dimensions = array<i32: 1>} : vector<16x100xi32>
    %c0 = arith.constant 0 : index
    %c0_0 = arith.constant 0 : index
    %1 = vector.load %arg1[%c0, %c0_0] : memref<16x1xi32, #tpu.memory_space<vmem>>, vector<16x1xi32>
    %2 = vector.broadcast %1 : vector<16x1xi32> to vector<16x100xi32>
    %3 = arith.cmpi eq, %0, %2 : vector<16x100xi32>
    %4 = arith.extui %3 : vector<16x100xi1> to vector<16x100xi32>
    %5 = arith.sitofp %4 : vector<16x100xi32> to vector<16x100xf32>
    %c0_1 = arith.constant 0 : index
    %c0_2 = arith.constant 0 : index
    %6 = vector.load %arg2[%c0_1, %c0_2] : memref<100x32xf32, #tpu.memory_space<vmem>>, vector<100x32xf32>
    %cst = arith.constant dense<0.000000e+00> : vector<16x32xf32>
    %7 = tpu.matmul %5, %6, %cst {dimension_numbers = #tpu.dot_dimension_numbers<[1], [0], [0], [1], [0, 0, 1, 1], [], []>} : vector<16x100xf32>, vector<100x32xf32>, vector<16x32xf32> -> vector<16x32xf32>
    %c0_3 = arith.constant 0 : index
    %c0_4 = arith.constant 0 : index
    %8 = vector.load %arg6[%c0_3, %c0_4] : memref<16x32xf32, #tpu.memory_space<vmem>>, vector<16x32xf32>
    tpu.vector_store %arg6[%c0_3, %c0_4], %7 {strides = array<i32>} : memref<16x32xf32, #tpu.memory_space<vmem>>, vector<16x32xf32>,
    %cst_5 = arith.constant 0.000000e+00 : f32
    %9 = vector.broadcast %cst_5 : f32 to vector<2x128xf32>
    %c0_6 = arith.constant 0 : index
    %c0_7 = arith.constant 0 : index
    %10 = vector.load %arg6[%c0_6, %c0_7] : memref<16x32xf32, #tpu.memory_space<vmem>>, vector<2x32xf32>
    %c0_8 = arith.constant 0 : index
    %c0_9 = arith.constant 0 : index
    %11 = vector.load %arg3[%c0_8, %c0_9] : memref<256x128xf32, #tpu.memory_space<vmem>>, vector<32x128xf32>
    %cst_10 = arith.constant dense<0.000000e+00> : vector<2x128xf32>
    %12 = tpu.matmul %10, %11, %cst_10 {dimension_numbers = #tpu.dot_dimension_numbers<[1], [0], [0], [1], [0, 0, 1, 1], [], []>} : vector<2x32xf32>, vector<32x128xf32>, vector<2x128xf32> -> vector<2x128xf32>
    %13 = arith.addf %9, %12 : vector<2x128xf32>
    %c2 = arith.constant 2 : index
    %c0_11 = arith.constant 0 : index
    %14 = vector.load %arg6[%c2, %c0_11] : memref<16x32xf32, #tpu.memory_space<vmem>>, vector<2x32xf32>
    %c32 = arith.constant 32 : index
    %c0_12 = arith.constant 0 : index
    %15 = vector.load %arg3[%c32, %c0_12] : memref<256x128xf32, #tpu.memory_space<vmem>>, vector<32x128xf32>
    %cst_13 = arith.constant dense<0.000000e+00> : vector<2x128xf32>
    %16 = tpu.matmul %14, %15, %cst_13 {dimension_numbers = #tpu.dot_dimension_numbers<[1], [0], [0], [1], [0, 0, 1, 1], [], []>} : vector<2x32xf32>, vector<32x128xf32>, vector<2x128xf32> -> vector<2x128xf32>
    %17 = arith.addf %13, %16 : vector<2x128xf32>
    %c4 = arith.constant 4 : index
    %c0_14 = arith.constant 0 : index
    %18 = vector.load %arg6[%c4, %c0_14] : memref<16x32xf32, #tpu.memory_space<vmem>>, vector<2x32xf32>
    %c64 = arith.constant 64 : index
    %c0_15 = arith.constant 0 : index
    %19 = vector.load %arg3[%c64, %c0_15] : memref<256x128xf32, #tpu.memory_space<vmem>>, vector<32x128xf32>
    %cst_16 = arith.constant dense<0.000000e+00> : vector<2x128xf32>
    %20 = tpu.matmul %18, %19, %cst_16 {dimension_numbers = #tpu.dot_dimension_numbers<[1], [0], [0], [1], [0, 0, 1, 1], [], []>} : vector<2x32xf32>, vector<32x128xf32>, vector<2x128xf32> -> vector<2x128xf32>
    %21 = arith.addf %17, %20 : vector<2x128xf32>
    %c6 = arith.constant 6 : index
    %c0_17 = arith.constant 0 : index
    %22 = vector.load %arg6[%c6, %c0_17] : memref<16x32xf32, #tpu.memory_space<vmem>>, vector<2x32xf32>
    %c96 = arith.constant 96 : index
    %c0_18 = arith.constant 0 : index
    %23 = vector.load %arg3[%c96, %c0_18] : memref<256x128xf32, #tpu.memory_space<vmem>>, vector<32x128xf32>
    %cst_19 = arith.constant dense<0.000000e+00> : vector<2x128xf32>
    %24 = tpu.matmul %22, %23, %cst_19 {dimension_numbers = #tpu.dot_dimension_numbers<[1], [0], [0], [1], [0, 0, 1, 1], [], []>} : vector<2x32xf32>, vector<32x128xf32>, vector<2x128xf32> -> vector<2x128xf32>
    %25 = arith.addf %21, %24 : vector<2x128xf32>
    %c8 = arith.constant 8 : index
    %c0_20 = arith.constant 0 : index
    %26 = vector.load %arg6[%c8, %c0_20] : memref<16x32xf32, #tpu.memory_space<vmem>>, vector<2x32xf32>
    %c128 = arith.constant 128 : index
    %c0_21 = arith.constant 0 : index
    %27 = vector.load %arg3[%c128, %c0_21] : memref<256x128xf32, #tpu.memory_space<vmem>>, vector<32x128xf32>
    %cst_22 = arith.constant dense<0.000000e+00> : vector<2x128xf32>
    %28 = tpu.matmul %26, %27, %cst_22 {dimension_numbers = #tpu.dot_dimension_numbers<[1], [0], [0], [1], [0, 0, 1, 1], [], []>} : vector<2x32xf32>, vector<32x128xf32>, vector<2x128xf32> -> vector<2x128xf32>
    %29 = arith.addf %25, %28 : vector<2x128xf32>
    %c10 = arith.constant 10 : index
    %c0_23 = arith.constant 0 : index
    %30 = vector.load %arg6[%c10, %c0_23] : memref<16x32xf32, #tpu.memory_space<vmem>>, vector<2x32xf32>
    %c160 = arith.constant 160 : index
    %c0_24 = arith.constant 0 : index
    %31 = vector.load %arg3[%c160, %c0_24] : memref<256x128xf32, #tpu.memory_space<vmem>>, vector<32x128xf32>
    %cst_25 = arith.constant dense<0.000000e+00> : vector<2x128xf32>
    %32 = tpu.matmul %30, %31, %cst_25 {dimension_numbers = #tpu.dot_dimension_numbers<[1], [0], [0], [1], [0, 0, 1, 1], [], []>} : vector<2x32xf32>, vector<32x128xf32>, vector<2x128xf32> -> vector<2x128xf32>
    %33 = arith.addf %29, %32 : vector<2x128xf32>
    %c12 = arith.constant 12 : index
    %c0_26 = arith.constant 0 : index
    %34 = vector.load %arg6[%c12, %c0_26] : memref<16x32xf32, #tpu.memory_space<vmem>>, vector<2x32xf32>
    %c192 = arith.constant 192 : index
    %c0_27 = arith.constant 0 : index
    %35 = vector.load %arg3[%c192, %c0_27] : memref<256x128xf32, #tpu.memory_space<vmem>>, vector<32x128xf32>
    %cst_28 = arith.constant dense<0.000000e+00> : vector<2x128xf32>
    %36 = tpu.matmul %34, %35, %cst_28 {dimension_numbers = #tpu.dot_dimension_numbers<[1], [0], [0], [1], [0, 0, 1, 1], [], []>} : vector<2x32xf32>, vector<32x128xf32>, vector<2x128xf32> -> vector<2x128xf32>
    %37 = arith.addf %33, %36 : vector<2x128xf32>
    %c14 = arith.constant 14 : index
    %c0_29 = arith.constant 0 : index
    %38 = vector.load %arg6[%c14, %c0_29] : memref<16x32xf32, #tpu.memory_space<vmem>>, vector<2x32xf32>
    %c224 = arith.constant 224 : index
    %c0_30 = arith.constant 0 : index
    %39 = vector.load %arg3[%c224, %c0_30] : memref<256x128xf32, #tpu.memory_space<vmem>>, vector<32x128xf32>
    %cst_31 = arith.constant dense<0.000000e+00> : vector<2x128xf32>
    %40 = tpu.matmul %38, %39, %cst_31 {dimension_numbers = #tpu.dot_dimension_numbers<[1], [0], [0], [1], [0, 0, 1, 1], [], []>} : vector<2x32xf32>, vector<32x128xf32>, vector<2x128xf32> -> vector<2x128xf32>
    %41 = arith.addf %37, %40 : vector<2x128xf32>
    %c0_32 = arith.constant 0 : index
    %c0_33 = arith.constant 0 : index
    %42 = vector.load %arg4[%c0_32, %c0_33] : memref<1x128xf32, #tpu.memory_space<vmem>>, vector<1x128xf32>
    %43 = vector.broadcast %42 : vector<1x128xf32> to vector<2x128xf32>
    %44 = arith.addf %41, %43 : vector<2x128xf32>
    %45 = tpu.iota {dimensions = array<i32: 1>} : vector<2x128xi32>
    %c5_i32 = arith.constant 5 : i32
    %46 = vector.broadcast %c5_i32 : i32 to vector<2x128xi32>
    %47 = arith.cmpi slt, %45, %46 : vector<2x128xi32>
    %cst_34 = arith.constant 0xFF800000 : f32
    %48 = vector.broadcast %cst_34 : f32 to vector<2x128xf32>
    %49 = arith.select %47, %44, %48 : vector<2x128xi1>, vector<2x128xf32>
    %cst_35 = arith.constant dense<0xFF800000> : vector<2xf32>
    %50 = vector.multi_reduction <maximumf>, %49, %cst_35 [1] : vector<2x128xf32> to vector<2xf32>
    %51 = vector.shape_cast %50 : vector<2xf32> to vector<2x1xf32>
    %52 = vector.broadcast %51 : vector<2x1xf32> to vector<2x128xf32>
    %53 = arith.subf %49, %52 : vector<2x128xf32>
    %54 = math.exp %53 : vector<2x128xf32>
    %cst_36 = arith.constant dense<0.000000e+00> : vector<2xf32>
    %55 = vector.multi_reduction <add>, %54, %cst_36 [1] : vector<2x128xf32> to vector<2xf32>
    %56 = vector.shape_cast %55 : vector<2xf32> to vector<2x1xf32>
    %57 = tpu.reciprocal %56 {approx = true} : vector<2x1xf32> -> vector<2x1xf32>
    %58 = vector.broadcast %57 : vector<2x1xf32> to vector<2x128xf32>
    %59 = arith.mulf %54, %58 : vector<2x128xf32>
    %c0_37 = arith.constant 0 : index
    %c0_38 = arith.constant 0 : index
    %60 = vector.load %arg5[%c0_37, %c0_38] : memref<2x128xf32, #tpu.memory_space<vmem>>, vector<2x128xf32>
    tpu.vector_store %arg5[%c0_37, %c0_38], %59 {strides = array<i32>} : memref<2x128xf32, #tpu.memory_space<vmem>>, vector<2x128xf32>,
    return
  }
  func.func @transform_0(%arg0: i32) -> (i32, i32) {
    %c0_i32 = arith.constant 0 : i32
    %c0_i32_0 = arith.constant 0 : i32
    %c0_i32_1 = arith.constant 0 : i32
    return %c0_i32, %c0_i32_0 : i32, i32
  }
  func.func @transform_1(%arg0: i32) -> (i32, i32) {
    %c0_i32 = arith.constant 0 : i32
    %c0_i32_0 = arith.constant 0 : i32
    %c0_i32_1 = arith.constant 0 : i32
    return %c0_i32, %c0_i32_0 : i32, i32
  }
  func.func @transform_2(%arg0: i32) -> (i32, i32) {
    %c0_i32 = arith.constant 0 : i32
    %c0_i32_0 = arith.constant 0 : i32
    %c0_i32_1 = arith.constant 0 : i32
    return %c0_i32, %c0_i32_0 : i32, i32
  }
  func.func @transform_3(%arg0: i32) -> (i32, i32) {
    %c0_i32 = arith.constant 0 : i32
    %c0_i32_0 = arith.constant 0 : i32
    %c0_i32_1 = arith.constant 0 : i32
    return %c0_i32, %c0_i32_0 : i32, i32
  }
  func.func @transform_4(%arg0: i32) -> (i32, i32) {
    %c0_i32 = arith.constant 0 : i32
    %c0_i32_0 = arith.constant 0 : i32
    %c0_i32_1 = arith.constant 0 : i32
    return %c0_i32, %c0_i32_0 : i32, i32
  }
}

</mosaic_0001>

<llo_original>
// kernel: tpu_custom_call.1
$region0: #{tpu_custom_call.1}
  #allocation0 [shape = 'u32[]', space=smem, size = 0x4, offset = 0x4, fixed_abs, tag = 'smem constant byte address 0x4 - core index']
  #allocation1 [shape = 'u32[72,128]{1,0:T(1,128)}', space=vmem, size = 0x9000, scoped, tag = 'internal scratch']
  #allocation2 [shape = 'f32[16,32]{1,0:T(8,128)}', space=vmem, size = 0x2000, scoped, tag = 'scratch operand']
  %s0 = inlined_call_operand.vmem [shape: s32[16,1], index: 0, kind: input, shape index: {}]
  %s1 = inlined_call_operand.vmem [shape: f32[100,32], index: 1, kind: input, shape index: {}]
  %s2 = inlined_call_operand.hbm [shape: f32[256,128], index: 2, kind: input, shape index: {}]
  %s3 = inlined_call_operand.vmem [shape: f32[1,128], index: 3, kind: input, shape index: {}]
  %s4 = inlined_call_operand.hbm [shape: f32[2,128], index: 4, kind: output, shape index: {}]
  %s5 = sld [smem:[#allocation0]]
  $region30: #{tpu_custom_call.1} parent=0
    _
  %s7 = ssub.s32 1, %s5
  %s8 = scalar_select 0, %s7, %s5
  $region1: #{tpu_custom_call.1} parent=0
    #allocation3 [shape = 'u8[131072]{0}', space=vmem, size = 0x20000, scoped, tag = 'input window, operand 2, single buffered']
    #allocation4 [shape = 's32[1]{0}', space=sflag, size = 0x4, scoped, tag = 'scoped memory for tpu_custom_call.1']
    #allocation5 [shape = 's32[1]{0}', space=sflag, size = 0x4, scoped, tag = 'scoped memory for tpu_custom_call.1']
    #allocation6 [shape = 'u8[1024]{0}', space=vmem, size = 0x400, scoped, tag = 'output window, operand 0, single buffered']
    %9 = vsyncpa [#allocation4], 0
    %10 = vsyncpa [#allocation5], 0
    // Predicated region
    $region2: #{tpu_custom_call.1} parent=1 // pred_check
      _
    $region3: #{tpu_custom_call.1} parent=1 // pred_check_branch
      %12 = sbr.rel (0) target = $region5
    $region4: #{tpu_custom_call.1} parent=1 // pred_region
      _
    $region5: #{tpu_custom_call.1} parent=1 // pred_fallthru
      _
    // Predicated region
    $region6: #{tpu_custom_call.1} parent=1 // pred_check
      _
    $region7: #{tpu_custom_call.1} parent=1 // pred_check_branch
      %14 = sbr.rel (0) target = $region9
    $region8: #{tpu_custom_call.1} parent=1 // pred_region
      _
    $region9: #{tpu_custom_call.1} parent=1 // pred_fallthru
      _
    // Predicated region
    $region10: #{tpu_custom_call.1} parent=1 // pred_check
      _
    $region11: #{tpu_custom_call.1} parent=1 // pred_check_branch
      %16 = sbr.rel (0) target = $region13
    $region12: #{tpu_custom_call.1} parent=1 // pred_region
      %18 = vsyncadd [#allocation4], 0
      %s19 = sshll.u32 %s2, 4
      %s20 = int_to_ptr.hbm [resolvable:$true] %s19
      %s21 = sshll.u32 [#allocation3], 4
      %s22 = int_to_ptr.vmem [resolvable:$true] %s21
      %27 = dma.hbm_to_vmem [thread:$0]  %s20, 4096, %s22, [#allocation4], 128, 128, 8
    $region13: #{tpu_custom_call.1} parent=1 // pred_fallthru
      _
    // Predicated region
    $region14: #{tpu_custom_call.1} parent=1 // pred_check
      _
    $region15: #{tpu_custom_call.1} parent=1 // pred_check_branch
      %29 = sbr.rel (0) target = $region17
    $region16: #{tpu_custom_call.1} parent=1 // pred_region
      _
    $region17: #{tpu_custom_call.1} parent=1 // pred_fallthru
      _
    // Predicated region
    $region18: #{tpu_custom_call.1} parent=1 // pred_check
      _
    $region19: #{tpu_custom_call.1} parent=1 // pred_check_branch
      %31 = sbr.rel (0) target = $region21
    $region20: #{tpu_custom_call.1} parent=1 // pred_region
      %33 = dma.done [#allocation4], 4096
    $region21: #{tpu_custom_call.1} parent=1 // pred_fallthru
      _
    %v34 = vlaneseq
    %v35 = vand.u32 %v34, 127
    %v36 = vld [vmem:[%s0] sm:$0xff]
    %v37 = vld [vmem:[%s0 + $0x8] sm:$0xff]
    %38 = vset.pattern.permute.xlu0 0
    %39 = vperm.xlu0 %38, %v36
    %v40 = vpop.permute.xlu0 %39
    %41 = vset.pattern.permute.xlu0 0
    %42 = vperm.xlu0 %41, %v37
    %v43 = vpop.permute.xlu0 %42
    %vm44 = vcmp.eq.s32.totalorder %v35, %v40
    %vm45 = vcmp.eq.s32.totalorder %v35, %v43
    %v46 = vsel %vm44, 1, 0
    %v47 = vsel %vm45, 1, 0
    %v48 = vcvt.s32.f32 %v46
    %v49 = vcvt.s32.f32 %v47
    %v50 = vld [vmem:[%s1] sm:$0xff]
    %v51 = vld [vmem:[%s1 + $0x8] sm:$0xff]
    %v52 = vld [vmem:[%s1 + $0x10] sm:$0xff]
    %v53 = vld [vmem:[%s1 + $0x18] sm:$0xff]
    %v54 = vld [vmem:[%s1 + $0x20] sm:$0xff]
    %v55 = vld [vmem:[%s1 + $0x28] sm:$0xff]
    %v56 = vld [vmem:[%s1 + $0x30] sm:$0xff]
    %v57 = vld [vmem:[%s1 + $0x38] sm:$0xff]
    %v58 = vld [vmem:[%s1 + $0x40] sm:$0xff]
    %v59 = vld [vmem:[%s1 + $0x48] sm:$0xff]
    %v60 = vld [vmem:[%s1 + $0x50] sm:$0xff]
    %v61 = vld [vmem:[%s1 + $0x58] sm:$0xff]
    %v62 = vld [vmem:[%s1 + $0x60] sm:$0xf]
    %vm63 = vcmask 818176
    %v65 = vsel %vm63, %v48, 0
    %v68 = vsel %vm63, %v49, 0
    %vm70 = vcmask 1043456
    %v72 = vsel %vm70, %v62, 0
    %74 = vmatpush.msra.mxu0 0.0
    %75 = vmatpush.msra.mxu0 0.0
    %76 = vmatpush.msra.mxu0 0.0
    %77 = vmatpush.msra.mxu0 %v72
    %78 = vmatpush.msra.mxu0 %v61
    %79 = vmatpush.msra.mxu0 %v60
    %80 = vmatpush.msra.mxu0 %v59
    %81 = vmatpush.msra.mxu0 %v58
    %82 = vmatpush.msra.mxu0 %v57
    %83 = vmatpush.msra.mxu0 %v56
    %84 = vmatpush.msra.mxu0 %v55
    %85 = vmatpush.msra.mxu0 %v54
    %86 = vmatpush.msra.mxu0 %v53
    %87 = vmatpush.msra.mxu0 %v52
    %88 = vmatpush.msra.mxu0 %v51
    %89 = vmatpush.msra.mxu0 %v50
    %90 = vmatmul.f32.gmra.mxu0 %v65
    %v91 = vpop.f32.mrf.mxu0
    %v92 = vadd.f32 0.0, %v91
    %93 = vmatmul.f32.gmra.mxu0 %v68
    %v94 = vpop.f32.mrf.mxu0
    %v95 = vadd.f32 0.0, %v94
    %96 = vdwg.mxu0
    %vm97 = vcmask 261120
    %98 = vst.msk [vmem:[#allocation2] sm:$0xff] %vm97, %v92
    %99 = vst.msk [vmem:[#allocation2 + $0x8] sm:$0xff] %vm97, %v95
    %v100 = vld [vmem:[#allocation2] sm:$0x3]
    %v101 = vld [vmem:[#allocation3] sm:$0xff]
    %v102 = vld [vmem:[#allocation3 + $0x8] sm:$0xff]
    %v103 = vld [vmem:[#allocation3 + $0x10] sm:$0xff]
    %v104 = vld [vmem:[#allocation3 + $0x18] sm:$0xff]
    %v105 = vld [vmem:[#allocation2 + $0x2] sm:$0x3]
    %v106 = vld [vmem:[#allocation3 + $0x20] sm:$0xff]
    %v107 = vld [vmem:[#allocation3 + $0x28] sm:$0xff]
    %v108 = vld [vmem:[#allocation3 + $0x30] sm:$0xff]
    %v109 = vld [vmem:[#allocation3 + $0x38] sm:$0xff]
    %v111 = vsel %vm97, %v105, 0
    %113 = vmatpush.msra.mxu0 0.0
    %114 = vmatpush.msra.mxu0 0.0
    %115 = vmatpush.msra.mxu0 0.0
    %116 = vmatpush.msra.mxu0 0.0
    %117 = vmatpush.msra.mxu0 0.0
    %118 = vmatpush.msra.mxu0 0.0
    %119 = vmatpush.msra.mxu0 0.0
    %120 = vmatpush.msra.mxu0 0.0
    %121 = vmatpush.msra.mxu0 0.0
    %122 = vmatpush.msra.mxu0 0.0
    %123 = vmatpush.msra.mxu0 0.0
    %124 = vmatpush.msra.mxu0 0.0
    %125 = vmatpush.msra.mxu0 %v109
    %126 = vmatpush.msra.mxu0 %v108
    %127 = vmatpush.msra.mxu0 %v107
    %128 = vmatpush.msra.mxu0 %v106
    %129 = vmatmul.f32.gmra.mxu0 %v111
    %v130 = vpop.f32.mrf.mxu0
    %v131 = vadd.f32 0.0, %v130
    %132 = vdwg.mxu0
    %v134 = vsel %vm97, %v100, 0
    %136 = vmatpush.msra.mxu0 0.0
    %137 = vmatpush.msra.mxu0 0.0
    %138 = vmatpush.msra.mxu0 0.0
    %139 = vmatpush.msra.mxu0 0.0
    %140 = vmatpush.msra.mxu0 0.0
    %141 = vmatpush.msra.mxu0 0.0
    %142 = vmatpush.msra.mxu0 0.0
    %143 = vmatpush.msra.mxu0 0.0
    %144 = vmatpush.msra.mxu0 0.0
    %145 = vmatpush.msra.mxu0 0.0
    %146 = vmatpush.msra.mxu0 0.0
    %147 = vmatpush.msra.mxu0 0.0
    %148 = vmatpush.msra.mxu0 %v104
    %149 = vmatpush.msra.mxu0 %v103
    %150 = vmatpush.msra.mxu0 %v102
    %151 = vmatpush.msra.mxu0 %v101
    %152 = vmatmul.f32.gmra.mxu0 %v134
    %v153 = vpop.f32.mrf.mxu0
    %v154 = vadd.f32 %v131, %v153
    %155 = vdwg.mxu0
    %v156 = vld [vmem:[#allocation2 + $0x4] sm:$0x3]
    %v157 = vld [vmem:[#allocation3 + $0x40] sm:$0xff]
    %v158 = vld [vmem:[#allocation3 + $0x48] sm:$0xff]
    %v159 = vld [vmem:[#allocation3 + $0x50] sm:$0xff]
    %v160 = vld [vmem:[#allocation3 + $0x58] sm:$0xff]
    %v162 = vsel %vm97, %v156, 0
    %164 = vmatpush.msra.mxu0 0.0
    %165 = vmatpush.msra.mxu0 0.0
    %166 = vmatpush.msra.mxu0 0.0
    %167 = vmatpush.msra.mxu0 0.0
    %168 = vmatpush.msra.mxu0 0.0
    %169 = vmatpush.msra.mxu0 0.0
    %170 = vmatpush.msra.mxu0 0.0
    %171 = vmatpush.msra.mxu0 0.0
    %172 = vmatpush.msra.mxu0 0.0
    %173 = vmatpush.msra.mxu0 0.0
    %174 = vmatpush.msra.mxu0 0.0
    %175 = vmatpush.msra.mxu0 0.0
    %176 = vmatpush.msra.mxu0 %v160
    %177 = vmatpush.msra.mxu0 %v159
    %178 = vmatpush.msra.mxu0 %v158
    %179 = vmatpush.msra.mxu0 %v157
    %180 = vmatmul.f32.gmra.mxu0 %v162
    %v181 = vpop.f32.mrf.mxu0
    %v182 = vadd.f32 0.0, %v181
    %183 = vdwg.mxu0
    %v184 = vadd.f32 %v154, %v182
    %v185 = vld [vmem:[#allocation2 + $0x6] sm:$0x3]
    %v186 = vld [vmem:[#allocation3 + $0x60] sm:$0xff]
    %v187 = vld [vmem:[#allocation3 + $0x68] sm:$0xff]
    %v188 = vld [vmem:[#allocation3 + $0x70] sm:$0xff]
    %v189 = vld [vmem:[#allocation3 + $0x78] sm:$0xff]
    %v191 = vsel %vm97, %v185, 0
    %193 = vmatpush.msra.mxu0 0.0
    %194 = vmatpush.msra.mxu0 0.0
    %195 = vmatpush.msra.mxu0 0.0
    %196 = vmatpush.msra.mxu0 0.0
    %197 = vmatpush.msra.mxu0 0.0
    %198 = vmatpush.msra.mxu0 0.0
    %199 = vmatpush.msra.mxu0 0.0
    %200 = vmatpush.msra.mxu0 0.0
    %201 = vmatpush.msra.mxu0 0.0
    %202 = vmatpush.msra.mxu0 0.0
    %203 = vmatpush.msra.mxu0 0.0
    %204 = vmatpush.msra.mxu0 0.0
    %205 = vmatpush.msra.mxu0 %v189
    %206 = vmatpush.msra.mxu0 %v188
    %207 = vmatpush.msra.mxu0 %v187
    %208 = vmatpush.msra.mxu0 %v186
    %209 = vmatmul.f32.gmra.mxu0 %v191
    %v210 = vpop.f32.mrf.mxu0
    %v211 = vadd.f32 0.0, %v210
    %212 = vdwg.mxu0
    %v213 = vadd.f32 %v184, %v211
    %v214 = vld [vmem:[#allocation2 + $0x8] sm:$0x3]
    %v215 = vld [vmem:[#allocation3 + $0x80] sm:$0xff]
    %v216 = vld [vmem:[#allocation3 + $0x88] sm:$0xff]
    %v217 = vld [vmem:[#allocation3 + $0x90] sm:$0xff]
    %v218 = vld [vmem:[#allocation3 + $0x98] sm:$0xff]
    %v220 = vsel %vm97, %v214, 0
    %222 = vmatpush.msra.mxu0 0.0
    %223 = vmatpush.msra.mxu0 0.0
    %224 = vmatpush.msra.mxu0 0.0
    %225 = vmatpush.msra.mxu0 0.0
    %226 = vmatpush.msra.mxu0 0.0
    %227 = vmatpush.msra.mxu0 0.0
    %228 = vmatpush.msra.mxu0 0.0
    %229 = vmatpush.msra.mxu0 0.0
    %230 = vmatpush.msra.mxu0 0.0
    %231 = vmatpush.msra.mxu0 0.0
    %232 = vmatpush.msra.mxu0 0.0
    %233 = vmatpush.msra.mxu0 0.0
    %234 = vmatpush.msra.mxu0 %v218
    %235 = vmatpush.msra.mxu0 %v217
    %236 = vmatpush.msra.mxu0 %v216
    %237 = vmatpush.msra.mxu0 %v215
    %238 = vmatmul.f32.gmra.mxu0 %v220
    %v239 = vpop.f32.mrf.mxu0
    %v240 = vadd.f32 0.0, %v239
    %241 = vdwg.mxu0
    %v242 = vadd.f32 %v213, %v240
    %v243 = vld [vmem:[#allocation2 + $0xa] sm:$0x3]
    %v244 = vld [vmem:[#allocation3 + $0xa0] sm:$0xff]
    %v245 = vld [vmem:[#allocation3 + $0xa8] sm:$0xff]
    %v246 = vld [vmem:[#allocation3 + $0xb0] sm:$0xff]
    %v247 = vld [vmem:[#allocation3 + $0xb8] sm:$0xff]
    %v249 = vsel %vm97, %v243, 0
    %251 = vmatpush.msra.mxu0 0.0
    %252 = vmatpush.msra.mxu0 0.0
    %253 = vmatpush.msra.mxu0 0.0
    %254 = vmatpush.msra.mxu0 0.0
    %255 = vmatpush.msra.mxu0 0.0
    %256 = vmatpush.msra.mxu0 0.0
    %257 = vmatpush.msra.mxu0 0.0
    %258 = vmatpush.msra.mxu0 0.0
    %259 = vmatpush.msra.mxu0 0.0
    %260 = vmatpush.msra.mxu0 0.0
    %261 = vmatpush.msra.mxu0 0.0
    %262 = vmatpush.msra.mxu0 0.0
    %263 = vmatpush.msra.mxu0 %v247
    %264 = vmatpush.msra.mxu0 %v246
    %265 = vmatpush.msra.mxu0 %v245
    %266 = vmatpush.msra.mxu0 %v244
    %267 = vmatmul.f32.gmra.mxu0 %v249
    %v268 = vpop.f32.mrf.mxu0
    %v269 = vadd.f32 0.0, %v268
    %270 = vdwg.mxu0
    %v271 = vadd.f32 %v242, %v269
    %v272 = vld [vmem:[#allocation2 + $0xc] sm:$0x3]
    %v273 = vld [vmem:[#allocation3 + $0xc0] sm:$0xff]
    %v274 = vld [vmem:[#allocation3 + $0xc8] sm:$0xff]
    %v275 = vld [vmem:[#allocation3 + $0xd0] sm:$0xff]
    %v276 = vld [vmem:[#allocation3 + $0xd8] sm:$0xff]
    %v278 = vsel %vm97, %v272, 0
    %280 = vmatpush.msra.mxu0 0.0
    %281 = vmatpush.msra.mxu0 0.0
    %282 = vmatpush.msra.mxu0 0.0
    %283 = vmatpush.msra.mxu0 0.0
    %284 = vmatpush.msra.mxu0 0.0
    %285 = vmatpush.msra.mxu0 0.0
    %286 = vmatpush.msra.mxu0 0.0
    %287 = vmatpush.msra.mxu0 0.0
    %288 = vmatpush.msra.mxu0 0.0
    %289 = vmatpush.msra.mxu0 0.0
    %290 = vmatpush.msra.mxu0 0.0
    %291 = vmatpush.msra.mxu0 0.0
    %292 = vmatpush.msra.mxu0 %v276
    %293 = vmatpush.msra.mxu0 %v275
    %294 = vmatpush.msra.mxu0 %v274
    %295 = vmatpush.msra.mxu0 %v273
    %296 = vmatmul.f32.gmra.mxu0 %v278
    %v297 = vpop.f32.mrf.mxu0
    %v298 = vadd.f32 0.0, %v297
    %299 = vdwg.mxu0
    %v300 = vadd.f32 %v271, %v298
    %v301 = vld [vmem:[#allocation2 + $0xe] sm:$0x3]
    %v302 = vld [vmem:[#allocation3 + $0xe0] sm:$0xff]
    %v303 = vld [vmem:[#allocation3 + $0xe8] sm:$0xff]
    %v304 = vld [vmem:[#allocation3 + $0xf0] sm:$0xff]
    %v305 = vld [vmem:[#allocation3 + $0xf8] sm:$0xff]
    %v307 = vsel %vm97, %v301, 0
    %309 = vmatpush.msra.mxu0 0.0
    %310 = vmatpush.msra.mxu0 0.0
    %311 = vmatpush.msra.mxu0 0.0
    %312 = vmatpush.msra.mxu0 0.0
    %313 = vmatpush.msra.mxu0 0.0
    %314 = vmatpush.msra.mxu0 0.0
    %315 = vmatpush.msra.mxu0 0.0
    %316 = vmatpush.msra.mxu0 0.0
    %317 = vmatpush.msra.mxu0 0.0
    %318 = vmatpush.msra.mxu0 0.0
    %319 = vmatpush.msra.mxu0 0.0
    %320 = vmatpush.msra.mxu0 0.0
    %321 = vmatpush.msra.mxu0 %v305
    %322 = vmatpush.msra.mxu0 %v304
    %323 = vmatpush.msra.mxu0 %v303
    %324 = vmatpush.msra.mxu0 %v302
    %325 = vmatmul.f32.gmra.mxu0 %v307
    %v326 = vpop.f32.mrf.mxu0
    %v327 = vadd.f32 0.0, %v326
    %328 = vdwg.mxu0
    %v329 = vadd.f32 %v300, %v327
    %v330 = vld [vmem:[%s3] sm:$0x1]
    %v332 = vperm.slane %v330, 0
    %v334 = vadd.f32 %v329, %v332
    %vm335 = vcmp.lt.s32.totalorder %v35, 5
    %v336 = vsel %vm335, %v334, -inf
    %vm337 = vcmask 1041408
    %v338 = vsel %vm337, %v336, -inf
    %339 = vmax.xlane.f32.xlu0 %v338
    %v340 = vpop.xlane.xlu0 %339
    %v341 = vsub.f32 %v336, %v340
    %v342 = vmul.f32 %v341, 1.442695
    %v343 = vpow.pop %v342
    %v344 = vsel %vm337, %v343, 0.0
    %345 = vadd.xlane.f32.xlu0 %v344
    %v346 = vpop.xlane.xlu0 %345
    %v347 = vrcp.pop %v346
    %v348 = vmul.f32 %v343, %v347
    %349 = vst [vmem:[#allocation6] sm:$0x3] %v348
    // Predicated region
    $region22: #{tpu_custom_call.1} parent=1 // pred_check
      _
    $region23: #{tpu_custom_call.1} parent=1 // pred_check_branch
      %351 = sbr.rel (0) target = $region25
    $region24: #{tpu_custom_call.1} parent=1 // pred_region
      %353 = vsyncadd [#allocation5], 0
      %s355 = sshll.u32 [#allocation6], 4
      %s356 = int_to_ptr.vmem [resolvable:$true] %s355
      %s357 = sshll.u32 %s4, 4
      %s358 = int_to_ptr.hbm [resolvable:$true] %s357
      %360 = dma.vmem_to_hbm [thread:$0]  %s356, 32, %s358, [#allocation5]
    $region25: #{tpu_custom_call.1} parent=1 // pred_fallthru
      _
    // Predicated region
    $region26: #{tpu_custom_call.1} parent=1 // pred_check
      _
    $region27: #{tpu_custom_call.1} parent=1 // pred_check_branch
      %362 = sbr.rel (0) target = $region29
    $region28: #{tpu_custom_call.1} parent=1 // pred_region
      %364 = dma.done [#allocation5], 32
    $region29: #{tpu_custom_call.1} parent=1 // pred_fallthru
      _
    %365 = vsyncpa [#allocation4], 1
    %366 = vsyncpa [#allocation5], 1

</llo_original>
